<compile_context>
chip_gen: v7x
topology: tpu7x:2x2x1
jax: 0.10.0
libtpu: 0.0.40
codegen_flags: <defaults>
</compile_context>

<pallas_src>
import jax
import jax.numpy as jnp
from jax.experimental import pallas as pl
from jax.experimental.pallas import tpu as pltpu


def _mish_kernel(x_ref, o_ref):
    xf = x_ref[...].astype(jnp.float32)
    # mish(x) = x * tanh(softplus(x)).  With t = e^x:
    #   tanh(log1p(t)) = ((1+t)^2 - 1) / ((1+t)^2 + 1) = t*(t+2) / (t*(t+2) + 2)
    # -> one EUP exp instead of exp + log1p + tanh (3 EUP ops / element).
    # Clamp the exp argument at 20 (PyTorch softplus threshold): for x > 20 the
    # ratio rounds to 1.0 in f32, so the result is x, matching torch exactly.
    t = jnp.exp(jnp.minimum(xf, 20.0))
    num = t * (t + 2.0)
    den = num + 2.0
    # EUP approximate reciprocal + two Newton-Raphson steps (pure VPU work,
    # hidden under the HBM stream) -> full f32 accuracy, no precise divide.
    r = pl.reciprocal(den, approx=True)
    r = r * (2.0 - den * r)
    r = r * (2.0 - den * r)
    o_ref[...] = (xf * (num * r)).astype(o_ref.dtype)


def mish_pallas(x: jax.Array, *, target_block_bytes: int = 2 * 1024 * 1024) -> jax.Array:
    """Applies Mish elementwise to an arbitrarily-shaped array."""
    orig_shape = x.shape
    dtype = x.dtype
    total = int(x.size)
    itemsize = jnp.dtype(dtype).itemsize
    # Sublane packing granularity: 8 rows for 32-bit, 16 for bf16, 32 for 8-bit.
    sub = max(8, 32 // itemsize)

    # ---- choose a lane-dense 2-D view (rows, lanes) without any HBM copy ----
    lanes = None
    for cand in (1024, 512, 256, 128):
        if total % cand == 0 and (total // cand) % sub == 0:
            lanes = cand
            break

    needs_pad = lanes is None
    if needs_pad:
        # Fallback (ragged sizes only): pad once to a (sub, 128)-aligned slab.
        lanes = 128
        rows = ((pl.cdiv(total, lanes) + sub - 1) // sub) * sub
        x2d = jnp.pad(jnp.ravel(x), (0, rows * lanes - total)).reshape(rows, lanes)
    else:
        rows = total // lanes
        x2d = jnp.reshape(x, (rows, lanes))  # contiguous reshape: no copy

    # ---- tile rows: ~target_block_bytes per block, multiple of `sub` ----
    rows_per_block = max(sub, (target_block_bytes // (lanes * itemsize)) // sub * sub)
    tile_rows = min(rows_per_block, rows)
    # Keep >= 2 blocks when possible so both TensorCores (v7x) get work.
    if tile_rows >= rows and rows >= 2 * sub:
        tile_rows = max(sub, (rows // 2) // sub * sub)
    grid = (pl.cdiv(rows, tile_rows),)

    out2d = pl.pallas_call(
        _mish_kernel,
        out_shape=jax.ShapeDtypeStruct((rows, lanes), dtype),
        grid_spec=pltpu.PrefetchScalarGridSpec(
            num_scalar_prefetch=0,
            grid=grid,
            in_specs=[pl.BlockSpec((tile_rows, lanes), lambda i: (i, 0))],
            out_specs=pl.BlockSpec((tile_rows, lanes), lambda i: (i, 0)),
        ),
        compiler_params=pltpu.CompilerParams(
            dimension_semantics=("parallel",)
        ),
    )(x2d)

    if needs_pad:
        return out2d.reshape(-1)[:total].reshape(orig_shape)
    return out2d.reshape(orig_shape)


def mish_reference(x: jax.Array) -> jax.Array:
    # Matches PyTorch: x * tanh(F.softplus(x)) with softplus threshold=20.
    xf = x.astype(jnp.float32)
    sp = jnp.where(xf > 20.0, xf, jnp.log1p(jnp.exp(jnp.minimum(xf, 20.0))))
    return (xf * jnp.tanh(sp)).astype(x.dtype)


if __name__ == "__main__":
    key = jax.random.PRNGKey(0)
    # Small NCHW input consistent with TextCNN-style conv activations.
    x = jax.random.normal(key, (2, 4, 16, 16), dtype=jnp.float32) * 5.0

    y = mish_pallas(x)
    y = jax.block_until_ready(y)

    y_ref = mish_reference(x)
    assert y.shape == x.shape and y.dtype == x.dtype
    assert jnp.max(jnp.abs(y - y_ref)) < 1e-5

    print("KERNEL_OK")
</pallas_src>

<mosaic_0001>
module attributes {stable_mosaic.version = 11 : i64} {
  func.func @_mish_kernel(%arg0: i32, %arg1: memref<8x256xf32, #tpu.memory_space<vmem>>, %arg2: memref<8x256xf32, #tpu.memory_space<vmem>>) attributes {dimension_semantics = [#tpu.dimension_semantics<parallel>], iteration_bounds = array<i64: 1>, scalar_prefetch = 0 : i64, scratch_operands = 0 : i64, tpu.core_type = #tpu.core_type<tc>, window_params = [{transform_indices = @transform_0, window_bounds = array<i64: 8, 256>}, {transform_indices = @transform_1, window_bounds = array<i64: 8, 256>}]} {
    %c0 = arith.constant 0 : index
    %c0_0 = arith.constant 0 : index
    %0 = vector.load %arg1[%c0, %c0_0] : memref<8x256xf32, #tpu.memory_space<vmem>>, vector<8x256xf32>
    %cst = arith.constant 2.000000e+01 : f32
    %1 = vector.broadcast %cst : f32 to vector<8x256xf32>
    %2 = arith.minimumf %0, %1 : vector<8x256xf32>
    %3 = math.exp %2 : vector<8x256xf32>
    %cst_1 = arith.constant 2.000000e+00 : f32
    %4 = vector.broadcast %cst_1 : f32 to vector<8x256xf32>
    %5 = arith.addf %3, %4 : vector<8x256xf32>
    %6 = arith.mulf %3, %5 : vector<8x256xf32>
    %cst_2 = arith.constant 2.000000e+00 : f32
    %7 = vector.broadcast %cst_2 : f32 to vector<8x256xf32>
    %8 = arith.addf %6, %7 : vector<8x256xf32>
    %9 = tpu.reciprocal %8 {approx = true} : vector<8x256xf32> -> vector<8x256xf32>
    %10 = arith.mulf %8, %9 : vector<8x256xf32>
    %cst_3 = arith.constant 2.000000e+00 : f32
    %11 = vector.broadcast %cst_3 : f32 to vector<8x256xf32>
    %12 = arith.subf %11, %10 : vector<8x256xf32>
    %13 = arith.mulf %9, %12 : vector<8x256xf32>
    %14 = arith.mulf %8, %13 : vector<8x256xf32>
    %cst_4 = arith.constant 2.000000e+00 : f32
    %15 = vector.broadcast %cst_4 : f32 to vector<8x256xf32>
    %16 = arith.subf %15, %14 : vector<8x256xf32>
    %17 = arith.mulf %13, %16 : vector<8x256xf32>
    %18 = arith.mulf %6, %17 : vector<8x256xf32>
    %19 = arith.mulf %0, %18 : vector<8x256xf32>
    %c0_5 = arith.constant 0 : index
    %c0_6 = arith.constant 0 : index
    %20 = vector.load %arg2[%c0_5, %c0_6] : memref<8x256xf32, #tpu.memory_space<vmem>>, vector<8x256xf32>
    tpu.vector_store %arg2[%c0_5, %c0_6], %19 {strides = array<i32>} : memref<8x256xf32, #tpu.memory_space<vmem>>, vector<8x256xf32>,
    return
  }
  func.func @transform_0(%arg0: i32) -> (i32, i32) {
    %c0_i32 = arith.constant 0 : i32
    %c0_i32_0 = arith.constant 0 : i32
    return %arg0, %c0_i32 : i32, i32
  }
  func.func @transform_1(%arg0: i32) -> (i32, i32) {
    %c0_i32 = arith.constant 0 : i32
    %c0_i32_0 = arith.constant 0 : i32
    return %arg0, %c0_i32 : i32, i32
  }
}

</mosaic_0001>

<llo_original>
// kernel: tpu_custom_call.1
$region0: #{tpu_custom_call.1}
  #allocation0 [shape = 'u32[]', space=smem, size = 0x4, offset = 0x4, fixed_abs, tag = 'smem constant byte address 0x4 - core index']
  #allocation1 [shape = 'u32[144,128]{1,0:T(1,128)}', space=vmem, size = 0x12000, scoped, tag = 'internal scratch']
  %s0 = inlined_call_operand.hbm [shape: f32[8,256], index: 0, kind: input, shape index: {}]
  %s1 = inlined_call_operand.hbm [shape: f32[8,256], index: 1, kind: output, shape index: {}]
  %s2 = sld [smem:[#allocation0]]
  $region18: #{tpu_custom_call.1} parent=0
    _
  %s4 = ssub.s32 1, %s2
  %s5 = scalar_select 0, %s4, %s2
  $region1: #{tpu_custom_call.1} parent=0
    #allocation2 [shape = 'u8[8192]{0}', space=vmem, size = 0x2000, scoped, tag = 'input window, operand 0, single buffered']
    #allocation3 [shape = 's32[1]{0}', space=sflag, size = 0x4, scoped, tag = 'scoped memory for tpu_custom_call.1']
    #allocation4 [shape = 's32[1]{0}', space=sflag, size = 0x4, scoped, tag = 'scoped memory for tpu_custom_call.1']
    #allocation5 [shape = 'u8[8192]{0}', space=vmem, size = 0x2000, scoped, tag = 'output window, operand 0, single buffered']
    %6 = vsyncpa [#allocation3], 0
    %7 = vsyncpa [#allocation4], 0
    // Predicated region
    $region2: #{tpu_custom_call.1} parent=1 // pred_check
      _
    $region3: #{tpu_custom_call.1} parent=1 // pred_check_branch
      %9 = sbr.rel (0) target = $region5
    $region4: #{tpu_custom_call.1} parent=1 // pred_region
      %s11 = ssub.s32 256, 256
      %12 = vsyncadd [#allocation3], %s11
      %s14 = sshll.u32 [#allocation2], 4
      %s15 = int_to_ptr.vmem [resolvable:$true] %s14
      %17 = dma.hbm_to_vmem [thread:$0]  %s0, 256, %s15, [#allocation3]
    $region5: #{tpu_custom_call.1} parent=1 // pred_fallthru
      _
    // Predicated region
    $region6: #{tpu_custom_call.1} parent=1 // pred_check
      _
    $region7: #{tpu_custom_call.1} parent=1 // pred_check_branch
      %19 = sbr.rel (0) target = $region9
    $region8: #{tpu_custom_call.1} parent=1 // pred_region
      %20 = dma.done [#allocation3], 256
    $region9: #{tpu_custom_call.1} parent=1 // pred_fallthru
      _
    %v21 = vld [vmem:[#allocation2] sm:$0xff]
    %v22 = vld [vmem:[#allocation2 + $0x8] sm:$0xff]
    %v23 = vmin.f32 %v21, 20.0
    %v24 = vmin.f32 %v22, 20.0
    %v25 = vmul.f32 %v23, 1.442695
    %v26 = vpow.pop %v25
    %v27 = vmul.f32 %v24, 1.442695
    %v28 = vpow.pop %v27
    %v29 = vadd.f32 %v26, 2.0
    %v30 = vadd.f32 %v28, 2.0
    %v31 = vmul.f32 %v26, %v29
    %v32 = vmul.f32 %v28, %v30
    %v33 = vadd.f32 %v31, 2.0
    %v34 = vadd.f32 %v32, 2.0
    %v35 = vrcp.pop %v33
    %v36 = vrcp.pop %v34
    %v37 = vmul.f32 %v33, %v35
    %v38 = vmul.f32 %v34, %v36
    %v39 = vsub.f32 2.0, %v37
    %v40 = vsub.f32 2.0, %v38
    %v41 = vmul.f32 %v35, %v39
    %v42 = vmul.f32 %v36, %v40
    %v43 = vmul.f32 %v33, %v41
    %v44 = vmul.f32 %v34, %v42
    %v45 = vsub.f32 2.0, %v43
    %v46 = vsub.f32 2.0, %v44
    %v47 = vmul.f32 %v41, %v45
    %v48 = vmul.f32 %v42, %v46
    %v49 = vmul.f32 %v31, %v47
    %v50 = vmul.f32 %v32, %v48
    %v51 = vmul.f32 %v21, %v49
    %v52 = vmul.f32 %v22, %v50
    %53 = vst [vmem:[#allocation5] sm:$0xff] %v51
    %54 = vst [vmem:[#allocation5 + $0x8] sm:$0xff] %v52
    // Predicated region
    $region10: #{tpu_custom_call.1} parent=1 // pred_check
      _
    $region11: #{tpu_custom_call.1} parent=1 // pred_check_branch
      %56 = sbr.rel (0) target = $region13
    $region12: #{tpu_custom_call.1} parent=1 // pred_region
      %s58 = ssub.s32 256, 256
      %59 = vsyncadd [#allocation4], %s58
      %s61 = sshll.u32 [#allocation5], 4
      %s62 = int_to_ptr.vmem [resolvable:$true] %s61
      %64 = dma.vmem_to_hbm [thread:$0]  %s62, 256, %s1, [#allocation4]
    $region13: #{tpu_custom_call.1} parent=1 // pred_fallthru
      _
    // Predicated region
    $region14: #{tpu_custom_call.1} parent=1 // pred_check
      _
    $region15: #{tpu_custom_call.1} parent=1 // pred_check_branch
      %66 = sbr.rel (0) target = $region17
    $region16: #{tpu_custom_call.1} parent=1 // pred_region
      %67 = dma.done [#allocation4], 256
    $region17: #{tpu_custom_call.1} parent=1 // pred_fallthru
      _
    %68 = vsyncpa [#allocation3], 1
    %69 = vsyncpa [#allocation4], 1

</llo_original>
